<compile_context>
chip_gen: v5e
topology: v5e:2x2
jax: 0.10.0
libtpu: 0.0.40
codegen_flags: <defaults>
</compile_context>

<pallas_src>
import math
import functools

import jax
import jax.numpy as jnp
from jax.experimental import pallas as pl
from jax.experimental.pallas import tpu as pltpu


# Tile targets sized against v7x's 64 MiB VMEM / 32 MiB default scoped limit
# (double-buffered inputs + accumulator stay at a few MiB per step); they are
# also MXU-friendly on v5e/v6e.  Small problems fall back to full-array tiles.
_TM = 256   # node-row tile (sublane dim of x / adj / output)
_TN = 256   # out-feature tile (lane dim)   -- multiple of 128 => unmasked vst
_TK = 512   # contraction tile over in_features


def _round_up(x, m):
    return ((x + m - 1) // m) * m


def _pad_and_tile(dim, target, align):
    """Return (padded_dim, tile) with tile | padded_dim and (8,128)-legal tiles."""
    if dim >= target:
        return _round_up(dim, target), target
    pad = _round_up(dim, align)
    return pad, pad


def _support_kernel(scal_ref, x_ref, w_ref, o_ref, acc_ref, *, compute_dtype):
    """support tile = sum_k x_tile @ (w_tile * (1 + alpha_w) + beta_w)."""
    k = pl.program_id(2)

    @pl.when(k == 0)
    def _init():
        acc_ref[...] = jnp.zeros_like(acc_ref)

    alpha_w = scal_ref[0]
    beta_w = scal_ref[1]
    # Weight modulation on the VPU in f32 (nearly free next to the MXU); the
    # MXU is fed in compute_dtype (bf16 on v6e/v7x) with f32 accumulation.
    w_mod = w_ref[...].astype(jnp.float32) * (1.0 + alpha_w) + beta_w
    acc_ref[...] += jnp.dot(
        x_ref[...].astype(compute_dtype),
        w_mod.astype(compute_dtype),
        preferred_element_type=jnp.float32,
    )

    @pl.when(k == pl.num_programs(2) - 1)
    def _finalize():
        o_ref[...] = acc_ref[...].astype(o_ref.dtype)


def _aggregate_kernel(scal_ref, adj_ref, s_ref, b_ref, o_ref, acc_ref, *,
                      compute_dtype):
    """out tile = sum_k adj_tile @ support_tile, bias modulation at finalize."""
    k = pl.program_id(2)

    @pl.when(k == 0)
    def _init():
        acc_ref[...] = jnp.zeros_like(acc_ref)

    acc_ref[...] += jnp.dot(
        adj_ref[...].astype(compute_dtype),
        s_ref[...].astype(compute_dtype),
        preferred_element_type=jnp.float32,
    )

    @pl.when(k == pl.num_programs(2) - 1)
    def _finalize():
        alpha_b = scal_ref[2]
        beta_b = scal_ref[3]
        bias_mod = b_ref[...].astype(jnp.float32) * (1.0 + alpha_b) + beta_b
        o_ref[...] = (acc_ref[...] + bias_mod).astype(o_ref.dtype)


@functools.partial(jax.jit, static_argnames=("use_bias", "use_bf16"))
def graph_neural_forward(x, adj, weight, bias, scalars, use_bias=True,
                         use_bf16=True):
    """scalars = float32[4] = [alpha_w, beta_w, alpha_b, beta_b]."""
    n, fi = x.shape
    fi_w, fo = weight.shape
    assert fi_w == fi and adj.shape == (n, n)

    compute_dtype = jnp.bfloat16 if use_bf16 else jnp.float32
    support_dtype = jnp.bfloat16 if use_bf16 else jnp.float32

    if use_bias:
        bias2d = bias.reshape(1, fo).astype(jnp.float32)
    else:
        # Zero bias + zero modulation reproduces the bias-free branch.
        bias2d = jnp.zeros((1, fo), jnp.float32)
        scalars = scalars.at[2].set(0.0).at[3].set(0.0)
    scalars = scalars.astype(jnp.float32)

    # Pad so the tiles divide every array; lane dims become multiples of 128
    # (lane-dense stores), sublane dims multiples of 8.  Zero padding is exact:
    # padded x rows/cols are zero, so padded support rows are zero and padded
    # output rows/cols are sliced off below.
    n_pad, tm = _pad_and_tile(n, _TM, 8)
    fo_pad, tn = _pad_and_tile(fo, _TN, 128)
    fi_pad, tk = _pad_and_tile(fi, _TK, 128)

    xp = jnp.pad(x, ((0, n_pad - n), (0, fi_pad - fi))).astype(compute_dtype)
    adjp = jnp.pad(adj, ((0, n_pad - n), (0, n_pad - n))).astype(compute_dtype)
    wp = jnp.pad(weight, ((0, fi_pad - fi), (0, fo_pad - fo))).astype(jnp.float32)
    bp = jnp.pad(bias2d, ((0, 0), (0, fo_pad - fo)))

    cparams = pltpu.CompilerParams(
        dimension_semantics=("parallel", "parallel", "arbitrary"))
    itemsize = jnp.dtype(compute_dtype).itemsize

    # ---- Stage 1: support = x @ (weight * (1+alpha_w) + beta_w) ------------
    support = pl.pallas_call(
        functools.partial(_support_kernel, compute_dtype=compute_dtype),
        out_shape=jax.ShapeDtypeStruct((n_pad, fo_pad), support_dtype),
        grid=(n_pad // tm, fo_pad // tn, fi_pad // tk),
        in_specs=[
            pl.BlockSpec(memory_space=pltpu.MemorySpace.SMEM),       # scalars
            pl.BlockSpec((tm, tk), lambda i, j, k: (i, k)),          # x
            pl.BlockSpec((tk, tn), lambda i, j, k: (k, j)),          # weight
        ],
        out_specs=pl.BlockSpec((tm, tn), lambda i, j, k: (i, j)),
        scratch_shapes=[pltpu.VMEM((tm, tn), jnp.float32)],
        compiler_params=cparams,
        cost_estimate=pl.CostEstimate(
            flops=2 * n_pad * fi_pad * fo_pad,
            transcendentals=0,
            bytes_accessed=(itemsize * n_pad * fi_pad
                            + 4 * fi_pad * fo_pad
                            + itemsize * n_pad * fo_pad)),
    )(scalars, xp, wp)

    # ---- Stage 2: out = adj @ support (+ modulated bias at finalize) -------
    out_padded = pl.pallas_call(
        functools.partial(_aggregate_kernel, compute_dtype=compute_dtype),
        out_shape=jax.ShapeDtypeStruct((n_pad, fo_pad), jnp.float32),
        grid=(n_pad // tm, fo_pad // tn, n_pad // tm),
        in_specs=[
            pl.BlockSpec(memory_space=pltpu.MemorySpace.SMEM),       # scalars
            pl.BlockSpec((tm, tm), lambda i, j, k: (i, k)),          # adj
            pl.BlockSpec((tm, tn), lambda i, j, k: (k, j)),          # support
            pl.BlockSpec((1, tn), lambda i, j, k: (0, j)),           # bias
        ],
        out_specs=pl.BlockSpec((tm, tn), lambda i, j, k: (i, j)),
        scratch_shapes=[pltpu.VMEM((tm, tn), jnp.float32)],
        compiler_params=cparams,
        cost_estimate=pl.CostEstimate(
            flops=2 * n_pad * n_pad * fo_pad,
            transcendentals=0,
            bytes_accessed=(itemsize * n_pad * n_pad
                            + itemsize * n_pad * fo_pad
                            + 4 * fo_pad
                            + 4 * n_pad * fo_pad)),
    )(scalars, adjp, support, bp)

    return out_padded[:n, :fo]


def _reference(x, adj, weight, bias, scalars, use_bias=True):
    alpha_w, beta_w, alpha_b, beta_b = scalars
    support = x @ (weight * (1.0 + alpha_w) + beta_w)
    out = adj @ support
    if use_bias:
        out = out + bias * (1.0 + alpha_b) + beta_b
    return out


if __name__ == "__main__":
    key = jax.random.PRNGKey(0)
    k_x, k_adj, k_w, k_b, k_wmod, k_bmod = jax.random.split(key, 6)

    # --- Small shapes consistent with the module's forward ------------------
    N, IN_F, OUT_F = 8, 16, 32
    stdv = 1.0 / math.sqrt(OUT_F)
    weight = jax.random.uniform(k_w, (IN_F, OUT_F), jnp.float32,
                                minval=-stdv, maxval=stdv)
    bias = jax.random.uniform(k_b, (OUT_F,), jnp.float32,
                              minval=-stdv, maxval=stdv)
    x = jax.random.normal(k_x, (N, IN_F), jnp.float32)
    adj = jax.random.uniform(k_adj, (N, N), jnp.float32)
    w_mod = jax.random.normal(k_wmod, (2,), jnp.float32) * 0.1
    b_mod = jax.random.normal(k_bmod, (2,), jnp.float32) * 0.1
    scalars = jnp.array([w_mod[0], w_mod[1], b_mod[0], b_mod[1]], jnp.float32)

    # f32 MXU path: tight check against the pure-JAX reference.
    out = jax.block_until_ready(
        graph_neural_forward(x, adj, weight, bias, scalars,
                             use_bias=True, use_bf16=False))
    ref = _reference(x, adj, weight, bias, scalars)
    assert out.shape == (N, OUT_F)
    assert jnp.allclose(out, ref, atol=1e-5, rtol=1e-5), "f32 path mismatch"

    # bf16-input MXU path (v6e/v7x fast path), f32 accumulation: loose check.
    out_bf16 = jax.block_until_ready(
        graph_neural_forward(x, adj, weight, bias, scalars,
                             use_bias=True, use_bf16=True))
    assert jnp.allclose(out_bf16, ref, atol=5e-2, rtol=5e-2), "bf16 path mismatch"

    # "w is None and b is None" branch: all modulation scalars = 0.
    out_none = jax.block_until_ready(
        graph_neural_forward(x, adj, weight, bias, jnp.zeros((4,), jnp.float32),
                             use_bias=True, use_bf16=False))
    ref_none = adj @ (x @ weight) + bias
    assert jnp.allclose(out_none, ref_none, atol=1e-5, rtol=1e-5)

    # --- Larger shapes: exercise a genuine multi-tile grid ------------------
    N2, IN2, OUT2 = 384, 256, 384
    kk = jax.random.split(jax.random.PRNGKey(1), 4)
    stdv2 = 1.0 / math.sqrt(OUT2)
    weight2 = jax.random.uniform(kk[0], (IN2, OUT2), jnp.float32,
                                 minval=-stdv2, maxval=stdv2)
    bias2 = jax.random.uniform(kk[1], (OUT2,), jnp.float32,
                               minval=-stdv2, maxval=stdv2)
    x2 = jax.random.normal(kk[2], (N2, IN2), jnp.float32)
    adj2 = jax.random.uniform(kk[3], (N2, N2), jnp.float32)

    out2 = jax.block_until_ready(
        graph_neural_forward(x2, adj2, weight2, bias2, scalars,
                             use_bias=True, use_bf16=False))
    ref2 = _reference(x2, adj2, weight2, bias2, scalars)
    assert out2.shape == (N2, OUT2)
    assert jnp.allclose(out2, ref2, atol=1e-3, rtol=1e-4), "tiled f32 mismatch"

    print("KERNEL_OK")
</pallas_src>

<mosaic_0001>
module attributes {stable_mosaic.version = 11 : i64} {
  func.func @_support_kernel(%arg0: i32, %arg1: i32, %arg2: i32, %arg3: memref<4xf32, #tpu.memory_space<smem>>, %arg4: memref<8x128xf32, #tpu.memory_space<vmem>>, %arg5: memref<128x128xf32, #tpu.memory_space<vmem>>, %arg6: memref<8x128xf32, #tpu.memory_space<vmem>>, %arg7: memref<8x128xf32, #tpu.memory_space<vmem>>) attributes {dimension_semantics = [#tpu.dimension_semantics<parallel>, #tpu.dimension_semantics<parallel>, #tpu.dimension_semantics<arbitrary>], iteration_bounds = array<i64: 1, 1, 1>, scalar_prefetch = 0 : i64, scratch_operands = 1 : i64, tpu.core_type = #tpu.core_type<tc>, window_params = [{transform_indices = @transform_0, window_bounds = array<i64: 4>}, {transform_indices = @transform_1, window_bounds = array<i64: 8, 128>}, {transform_indices = @transform_2, window_bounds = array<i64: 128, 128>}, {transform_indices = @transform_3, window_bounds = array<i64: 8, 128>}]} {
    %c0_i32 = arith.constant 0 : i32
    %0 = arith.cmpi eq, %arg2, %c0_i32 : i32
    %1 = arith.extui %0 : i1 to i32
    %c0_i32_0 = arith.constant 0 : i32
    %2 = arith.cmpi ne, %1, %c0_i32_0 : i32
    scf.if %2 {
      %cst_12 = arith.constant 0.000000e+00 : f32
      %19 = vector.broadcast %cst_12 : f32 to vector<8x128xf32>
      %c0_13 = arith.constant 0 : index
      %c0_14 = arith.constant 0 : index
      %20 = vector.load %arg7[%c0_13, %c0_14] : memref<8x128xf32, #tpu.memory_space<vmem>>, vector<8x128xf32>
      tpu.vector_store %arg7[%c0_13, %c0_14], %19 {strides = array<i32>} : memref<8x128xf32, #tpu.memory_space<vmem>>, vector<8x128xf32>,
    } else {
    }
    %c0 = arith.constant 0 : index
    %3 = memref.load %arg3[%c0] : memref<4xf32, #tpu.memory_space<smem>>
    %c1 = arith.constant 1 : index
    %4 = memref.load %arg3[%c1] : memref<4xf32, #tpu.memory_space<smem>>
    %c0_1 = arith.constant 0 : index
    %c0_2 = arith.constant 0 : index
    %5 = vector.load %arg5[%c0_1, %c0_2] : memref<128x128xf32, #tpu.memory_space<vmem>>, vector<128x128xf32>
    %cst = arith.constant 1.000000e+00 : f32
    %6 = arith.addf %cst, %3 : f32
    %7 = vector.broadcast %6 : f32 to vector<128x128xf32>
    %8 = arith.mulf %5, %7 : vector<128x128xf32>
    %9 = vector.broadcast %4 : f32 to vector<128x128xf32>
    %10 = arith.addf %8, %9 : vector<128x128xf32>
    %c0_3 = arith.constant 0 : index
    %c0_4 = arith.constant 0 : index
    %11 = vector.load %arg7[%c0_3, %c0_4] : memref<8x128xf32, #tpu.memory_space<vmem>>, vector<8x128xf32>
    %c0_5 = arith.constant 0 : index
    %c0_6 = arith.constant 0 : index
    %12 = vector.load %arg4[%c0_5, %c0_6] : memref<8x128xf32, #tpu.memory_space<vmem>>, vector<8x128xf32>
    %cst_7 = arith.constant dense<0.000000e+00> : vector<8x128xf32>
    %13 = tpu.matmul %12, %10, %cst_7 {dimension_numbers = #tpu.dot_dimension_numbers<[1], [0], [0], [1], [0, 0, 1, 1], [], []>} : vector<8x128xf32>, vector<128x128xf32>, vector<8x128xf32> -> vector<8x128xf32>
    %14 = arith.addf %11, %13 : vector<8x128xf32>
    %c0_8 = arith.constant 0 : index
    %c0_9 = arith.constant 0 : index
    %15 = vector.load %arg7[%c0_8, %c0_9] : memref<8x128xf32, #tpu.memory_space<vmem>>, vector<8x128xf32>
    tpu.vector_store %arg7[%c0_8, %c0_9], %14 {strides = array<i32>} : memref<8x128xf32, #tpu.memory_space<vmem>>, vector<8x128xf32>,
    %c0_i32_10 = arith.constant 0 : i32
    %16 = arith.cmpi eq, %arg2, %c0_i32_10 : i32
    %17 = arith.extui %16 : i1 to i32
    %c0_i32_11 = arith.constant 0 : i32
    %18 = arith.cmpi ne, %17, %c0_i32_11 : i32
    scf.if %18 {
      %c0_12 = arith.constant 0 : index
      %c0_13 = arith.constant 0 : index
      %19 = vector.load %arg7[%c0_12, %c0_13] : memref<8x128xf32, #tpu.memory_space<vmem>>, vector<8x128xf32>
      %c0_14 = arith.constant 0 : index
      %c0_15 = arith.constant 0 : index
      %20 = vector.load %arg6[%c0_14, %c0_15] : memref<8x128xf32, #tpu.memory_space<vmem>>, vector<8x128xf32>
      tpu.vector_store %arg6[%c0_14, %c0_15], %19 {strides = array<i32>} : memref<8x128xf32, #tpu.memory_space<vmem>>, vector<8x128xf32>,
    } else {
    }
    return
  }
  func.func @transform_0(%arg0: i32, %arg1: i32, %arg2: i32) -> i32 {
    %c0_i32 = arith.constant 0 : i32
    %c0_i32_0 = arith.constant 0 : i32
    return %c0_i32 : i32
  }
  func.func @transform_1(%arg0: i32, %arg1: i32, %arg2: i32) -> (i32, i32) {
    %c0_i32 = arith.constant 0 : i32
    return %arg0, %arg2 : i32, i32
  }
  func.func @transform_2(%arg0: i32, %arg1: i32, %arg2: i32) -> (i32, i32) {
    %c0_i32 = arith.constant 0 : i32
    return %arg2, %arg1 : i32, i32
  }
  func.func @transform_3(%arg0: i32, %arg1: i32, %arg2: i32) -> (i32, i32) {
    %c0_i32 = arith.constant 0 : i32
    return %arg0, %arg1 : i32, i32
  }
}

module attributes {stable_mosaic.version = 11 : i64} {
  func.func @_aggregate_kernel(%arg0: i32, %arg1: i32, %arg2: i32, %arg3: memref<4xf32, #tpu.memory_space<smem>>, %arg4: memref<8x8xf32, #tpu.memory_space<vmem>>, %arg5: memref<8x128xf32, #tpu.memory_space<vmem>>, %arg6: memref<1x128xf32, #tpu.memory_space<vmem>>, %arg7: memref<8x128xf32, #tpu.memory_space<vmem>>, %arg8: memref<8x128xf32, #tpu.memory_space<vmem>>) attributes {dimension_semantics = [#tpu.dimension_semantics<parallel>, #tpu.dimension_semantics<parallel>, #tpu.dimension_semantics<arbitrary>], iteration_bounds = array<i64: 1, 1, 1>, scalar_prefetch = 0 : i64, scratch_operands = 1 : i64, tpu.core_type = #tpu.core_type<tc>, window_params = [{transform_indices = @transform_0, window_bounds = array<i64: 4>}, {transform_indices = @transform_1, window_bounds = array<i64: 8, 8>}, {transform_indices = @transform_2, window_bounds = array<i64: 8, 128>}, {transform_indices = @transform_3, window_bounds = array<i64: 1, 128>}, {transform_indices = @transform_4, window_bounds = array<i64: 8, 128>}]} {
    %c0_i32 = arith.constant 0 : i32
    %0 = arith.cmpi eq, %arg2, %c0_i32 : i32
    %1 = arith.extui %0 : i1 to i32
    %c0_i32_0 = arith.constant 0 : i32
    %2 = arith.cmpi ne, %1, %c0_i32_0 : i32
    scf.if %2 {
      %cst_10 = arith.constant 0.000000e+00 : f32
      %12 = vector.broadcast %cst_10 : f32 to vector<8x128xf32>
      %c0_11 = arith.constant 0 : index
      %c0_12 = arith.constant 0 : index
      %13 = vector.load %arg8[%c0_11, %c0_12] : memref<8x128xf32, #tpu.memory_space<vmem>>, vector<8x128xf32>
      tpu.vector_store %arg8[%c0_11, %c0_12], %12 {strides = array<i32>} : memref<8x128xf32, #tpu.memory_space<vmem>>, vector<8x128xf32>,
    } else {
    }
    %c0 = arith.constant 0 : index
    %c0_1 = arith.constant 0 : index
    %3 = vector.load %arg8[%c0, %c0_1] : memref<8x128xf32, #tpu.memory_space<vmem>>, vector<8x128xf32>
    %c0_2 = arith.constant 0 : index
    %c0_3 = arith.constant 0 : index
    %4 = vector.load %arg4[%c0_2, %c0_3] : memref<8x8xf32, #tpu.memory_space<vmem>>, vector<8x8xf32>
    %c0_4 = arith.constant 0 : index
    %c0_5 = arith.constant 0 : index
    %5 = vector.load %arg5[%c0_4, %c0_5] : memref<8x128xf32, #tpu.memory_space<vmem>>, vector<8x128xf32>
    %cst = arith.constant dense<0.000000e+00> : vector<8x128xf32>
    %6 = tpu.matmul %4, %5, %cst {dimension_numbers = #tpu.dot_dimension_numbers<[1], [0], [0], [1], [0, 0, 1, 1], [], []>} : vector<8x8xf32>, vector<8x128xf32>, vector<8x128xf32> -> vector<8x128xf32>
    %7 = arith.addf %3, %6 : vector<8x128xf32>
    %c0_6 = arith.constant 0 : index
    %c0_7 = arith.constant 0 : index
    %8 = vector.load %arg8[%c0_6, %c0_7] : memref<8x128xf32, #tpu.memory_space<vmem>>, vector<8x128xf32>
    tpu.vector_store %arg8[%c0_6, %c0_7], %7 {strides = array<i32>} : memref<8x128xf32, #tpu.memory_space<vmem>>, vector<8x128xf32>,
    %c0_i32_8 = arith.constant 0 : i32
    %9 = arith.cmpi eq, %arg2, %c0_i32_8 : i32
    %10 = arith.extui %9 : i1 to i32
    %c0_i32_9 = arith.constant 0 : i32
    %11 = arith.cmpi ne, %10, %c0_i32_9 : i32
    scf.if %11 {
      %c2 = arith.constant 2 : index
      %12 = memref.load %arg3[%c2] : memref<4xf32, #tpu.memory_space<smem>>
      %c3 = arith.constant 3 : index
      %13 = memref.load %arg3[%c3] : memref<4xf32, #tpu.memory_space<smem>>
      %c0_10 = arith.constant 0 : index
      %c0_11 = arith.constant 0 : index
      %14 = vector.load %arg6[%c0_10, %c0_11] : memref<1x128xf32, #tpu.memory_space<vmem>>, vector<1x128xf32>
      %cst_12 = arith.constant 1.000000e+00 : f32
      %15 = arith.addf %cst_12, %12 : f32
      %16 = vector.broadcast %15 : f32 to vector<1x128xf32>
      %17 = arith.mulf %14, %16 : vector<1x128xf32>
      %18 = vector.broadcast %13 : f32 to vector<1x128xf32>
      %19 = arith.addf %17, %18 : vector<1x128xf32>
      %c0_13 = arith.constant 0 : index
      %c0_14 = arith.constant 0 : index
      %20 = vector.load %arg8[%c0_13, %c0_14] : memref<8x128xf32, #tpu.memory_space<vmem>>, vector<8x128xf32>
      %21 = vector.broadcast %19 : vector<1x128xf32> to vector<8x128xf32>
      %22 = arith.addf %20, %21 : vector<8x128xf32>
      %c0_15 = arith.constant 0 : index
      %c0_16 = arith.constant 0 : index
      %23 = vector.load %arg7[%c0_15, %c0_16] : memref<8x128xf32, #tpu.memory_space<vmem>>, vector<8x128xf32>
      tpu.vector_store %arg7[%c0_15, %c0_16], %22 {strides = array<i32>} : memref<8x128xf32, #tpu.memory_space<vmem>>, vector<8x128xf32>,
    } else {
    }
    return
  }
  func.func @transform_0(%arg0: i32, %arg1: i32, %arg2: i32) -> i32 {
    %c0_i32 = arith.constant 0 : i32
    %c0_i32_0 = arith.constant 0 : i32
    return %c0_i32 : i32
  }
  func.func @transform_1(%arg0: i32, %arg1: i32, %arg2: i32) -> (i32, i32) {
    %c0_i32 = arith.constant 0 : i32
    return %arg0, %arg2 : i32, i32
  }
  func.func @transform_2(%arg0: i32, %arg1: i32, %arg2: i32) -> (i32, i32) {
    %c0_i32 = arith.constant 0 : i32
    return %arg2, %arg1 : i32, i32
  }
  func.func @transform_3(%arg0: i32, %arg1: i32, %arg2: i32) -> (i32, i32) {
    %c0_i32 = arith.constant 0 : i32
    %c0_i32_0 = arith.constant 0 : i32
    return %c0_i32, %arg1 : i32, i32
  }
  func.func @transform_4(%arg0: i32, %arg1: i32, %arg2: i32) -> (i32, i32) {
    %c0_i32 = arith.constant 0 : i32
    return %arg0, %arg1 : i32, i32
  }
}

</mosaic_0001>

<llo_original>
// kernel: graph_neural_forward.3
$region0: #{graph_neural_forward.3}
  #allocation0 [shape = 'u32[]', space=smem, size = 0x4, offset = 0x4, fixed_abs, tag = 'smem constant byte address 0x4 - core index']
  #allocation1 [shape = 'u32[72,128]{1,0:T(1,128)}', space=vmem, size = 0x9000, scoped, tag = 'internal scratch']
  #allocation2 [shape = 'f32[8,128]{1,0:T(8,128)}', space=vmem, size = 0x1000, scoped, tag = 'scratch operand']
  %s0 = inlined_call_operand.vmem [shape: f32[4], index: 0, kind: input, shape index: {}]
  %s1 = inlined_call_operand.vmem [shape: f32[8,8], index: 1, kind: input, shape index: {}]
  %s2 = inlined_call_operand.vmem [shape: f32[8,128], index: 2, kind: input, shape index: {}]
  %s3 = inlined_call_operand.vmem [shape: f32[1,128], index: 3, kind: input, shape index: {}]
  %s4 = inlined_call_operand.hbm [shape: f32[8,128], index: 4, kind: output, shape index: {}]
  %s5 = sld [smem:[#allocation0]]
  $region38: #{graph_neural_forward.3} parent=0
    _
  %s7 = ssub.s32 1, %s5
  %s8 = scalar_select 0, %s7, %s5
  $region1: #{graph_neural_forward.3} parent=0
    #allocation3 [shape = 'u8[512]{0}', space=smem, size = 0x200, scoped, tag = 'input window, operand 0, single buffered']
    #allocation4 [shape = 's32[1]{0}', space=sflag, size = 0x4, scoped, tag = 'scoped memory for graph_neural_forward.3']
    #allocation5 [shape = 's32[1]{0}', space=sflag, size = 0x4, scoped, tag = 'scoped memory for graph_neural_forward.3']
    #allocation6 [shape = 'u8[4096]{0}', space=vmem, size = 0x1000, scoped, tag = 'output window, operand 0, single buffered']
    %9 = vsyncpa [#allocation5], 0
    %10 = vsyncpa [#allocation4], 0
    // Predicated region
    $region2: #{graph_neural_forward.3} parent=1 // pred_check
      _
    $region3: #{graph_neural_forward.3} parent=1 // pred_check_branch
      %12 = sbr.rel (0) target = $region5
    $region4: #{graph_neural_forward.3} parent=1 // pred_region
      %14 = vsyncadd [#allocation5], 0
      %s16 = sshll.u32 %s0, 4
      %s17 = int_to_ptr.vmem [resolvable:$true] %s16
      %19 = dma.vmem_to_smem %s17, 16, [#allocation3], [#allocation5]
    $region5: #{graph_neural_forward.3} parent=1 // pred_fallthru
      _
    // Predicated region
    $region6: #{graph_neural_forward.3} parent=1 // pred_check
      _
    $region7: #{graph_neural_forward.3} parent=1 // pred_check_branch
      %21 = sbr.rel (0) target = $region9
    $region8: #{graph_neural_forward.3} parent=1 // pred_region
      _
    $region9: #{graph_neural_forward.3} parent=1 // pred_fallthru
      _
    // Predicated region
    $region10: #{graph_neural_forward.3} parent=1 // pred_check
      _
    $region11: #{graph_neural_forward.3} parent=1 // pred_check_branch
      %23 = sbr.rel (0) target = $region13
    $region12: #{graph_neural_forward.3} parent=1 // pred_region
      _
    $region13: #{graph_neural_forward.3} parent=1 // pred_fallthru
      _
    // Predicated region
    $region14: #{graph_neural_forward.3} parent=1 // pred_check
      _
    $region15: #{graph_neural_forward.3} parent=1 // pred_check_branch
      %25 = sbr.rel (0) target = $region17
    $region16: #{graph_neural_forward.3} parent=1 // pred_region
      _
    $region17: #{graph_neural_forward.3} parent=1 // pred_fallthru
      _
    // Predicated region
    $region18: #{graph_neural_forward.3} parent=1 // pred_check
      _
    $region19: #{graph_neural_forward.3} parent=1 // pred_check_branch
      %27 = sbr.rel (0) target = $region21
    $region20: #{graph_neural_forward.3} parent=1 // pred_region
      %29 = dma.done [#allocation5], 16
    $region21: #{graph_neural_forward.3} parent=1 // pred_fallthru
      _
    %30 = sfence
    %p31 = scmp.eq.s32.totalorder 0, 0
    // Predicated region
    $region22: #{graph_neural_forward.3} parent=1 // pred_check
      %p32 = pneg %p31
    $region23: #{graph_neural_forward.3} parent=1 // pred_check_branch
      %34 = sbr.rel (%p32) target = $region25
    $region24: #{graph_neural_forward.3} parent=1 // pred_region
      %35 = vst [vmem:[#allocation2] sm:$0xff] 0.0
    $region25: #{graph_neural_forward.3} parent=1 // pred_fallthru
      _
    %v36 = vld [vmem:[#allocation2] sm:$0xff]
    %v37 = vld [vmem:[%s1] sm:$0xff]
    %v38 = vld [vmem:[%s2] sm:$0xff]
    %vm39 = vcmask 64512
    %v41 = vsel %vm39, %v37, 0
    %43 = vmatpush.msra.mxu0 0.0
    %44 = vmatpush.msra.mxu0 0.0
    %45 = vmatpush.msra.mxu0 0.0
    %46 = vmatpush.msra.mxu0 0.0
    %47 = vmatpush.msra.mxu0 0.0
    %48 = vmatpush.msra.mxu0 0.0
    %49 = vmatpush.msra.mxu0 0.0
    %50 = vmatpush.msra.mxu0 0.0
    %51 = vmatpush.msra.mxu0 0.0
    %52 = vmatpush.msra.mxu0 0.0
    %53 = vmatpush.msra.mxu0 0.0
    %54 = vmatpush.msra.mxu0 0.0
    %55 = vmatpush.msra.mxu0 0.0
    %56 = vmatpush.msra.mxu0 0.0
    %57 = vmatpush.msra.mxu0 0.0
    %58 = vmatpush.msra.mxu0 %v38
    %59 = vmatmul.f32.gmra.mxu0 %v41
    %v60 = vpop.f32.mrf.mxu0
    %v61 = vadd.f32 0.0, %v60
    %62 = vdwg.mxu0
    %v63 = vadd.f32 %v36, %v61
    %64 = vst [vmem:[#allocation2] sm:$0xff] %v63
    // Predicated region
    $region26: #{graph_neural_forward.3} parent=1 // pred_check
      %p65 = pneg %p31
    $region27: #{graph_neural_forward.3} parent=1 // pred_check_branch
      %67 = sbr.rel (%p65) target = $region29
    $region28: #{graph_neural_forward.3} parent=1 // pred_region
      %s68 = sld [smem:[#allocation3 + $0x2]]
      %s69 = sld [smem:[#allocation3 + $0x3]]
      %v70 = vld [vmem:[%s3] sm:$0x1]
      %s71 = sadd.f32 %s68, 1.0
      %v72 = vstv %s71
      %v73 = vmul.f32 %v70, %v72
      %v74 = vstv %s69
      %v75 = vadd.f32 %v73, %v74
      %v76 = vld [vmem:[#allocation2] sm:$0xff]
      %v78 = vperm.slane %v75, 0
      %v80 = vadd.f32 %v76, %v78
      %81 = vst [vmem:[#allocation6] sm:$0xff] %v80
    $region29: #{graph_neural_forward.3} parent=1 // pred_fallthru
      _
    // Predicated region
    $region30: #{graph_neural_forward.3} parent=1 // pred_check
      _
    $region31: #{graph_neural_forward.3} parent=1 // pred_check_branch
      %83 = sbr.rel (0) target = $region33
    $region32: #{graph_neural_forward.3} parent=1 // pred_region
      %85 = vsyncadd [#allocation4], 0
      %s87 = sshll.u32 [#allocation6], 4
      %s88 = int_to_ptr.vmem [resolvable:$true] %s87
      %s89 = sshll.u32 %s4, 4
      %s90 = int_to_ptr.hbm [resolvable:$true] %s89
      %92 = dma.vmem_to_hbm [thread:$0]  %s88, 128, %s90, [#allocation4]
    $region33: #{graph_neural_forward.3} parent=1 // pred_fallthru
      _
    // Predicated region
    $region34: #{graph_neural_forward.3} parent=1 // pred_check
      _
    $region35: #{graph_neural_forward.3} parent=1 // pred_check_branch
      %94 = sbr.rel (0) target = $region37
    $region36: #{graph_neural_forward.3} parent=1 // pred_region
      %96 = dma.done [#allocation4], 128
    $region37: #{graph_neural_forward.3} parent=1 // pred_fallthru
      _
    %97 = vsyncpa [#allocation4], 1
    %98 = vsyncpa [#allocation5], 1

// kernel: graph_neural_forward.2
$region0: #{graph_neural_forward.2}
  #allocation0 [shape = 'u32[]', space=smem, size = 0x4, offset = 0x4, fixed_abs, tag = 'smem constant byte address 0x4 - core index']
  #allocation1 [shape = 'u32[72,128]{1,0:T(1,128)}', space=vmem, size = 0x9000, scoped, tag = 'internal scratch']
  #allocation2 [shape = 'f32[8,128]{1,0:T(8,128)}', space=vmem, size = 0x1000, scoped, tag = 'scratch operand']
  %s0 = inlined_call_operand.vmem [shape: f32[4], index: 0, kind: input, shape index: {}]
  %s1 = inlined_call_operand.vmem [shape: f32[8,128], index: 1, kind: input, shape index: {}]
  %s2 = inlined_call_operand.vmem [shape: f32[128,128], index: 2, kind: input, shape index: {}]
  %s3 = inlined_call_operand.vmem [shape: f32[8,128], index: 3, kind: output, shape index: {}]
  %s4 = sld [smem:[#allocation0]]
  $region34: #{graph_neural_forward.2} parent=0
    _
  %s6 = ssub.s32 1, %s4
  %s7 = scalar_select 0, %s6, %s4
  $region1: #{graph_neural_forward.2} parent=0
    #allocation3 [shape = 'u8[512]{0}', space=smem, size = 0x200, scoped, tag = 'input window, operand 0, single buffered']
    #allocation4 [shape = 's32[1]{0}', space=sflag, size = 0x4, scoped, tag = 'scoped memory for graph_neural_forward.2']
    %8 = vsyncpa [#allocation4], 0
    // Predicated region
    $region2: #{graph_neural_forward.2} parent=1 // pred_check
      _
    $region3: #{graph_neural_forward.2} parent=1 // pred_check_branch
      %10 = sbr.rel (0) target = $region5
    $region4: #{graph_neural_forward.2} parent=1 // pred_region
      %12 = vsyncadd [#allocation4], 0
      %s14 = sshll.u32 %s0, 4
      %s15 = int_to_ptr.vmem [resolvable:$true] %s14
      %17 = dma.vmem_to_smem %s15, 16, [#allocation3], [#allocation4]
    $region5: #{graph_neural_forward.2} parent=1 // pred_fallthru
      _
    // Predicated region
    $region6: #{graph_neural_forward.2} parent=1 // pred_check
      _
    $region7: #{graph_neural_forward.2} parent=1 // pred_check_branch
      %19 = sbr.rel (0) target = $region9
    $region8: #{graph_neural_forward.2} parent=1 // pred_region
      _
    $region9: #{graph_neural_forward.2} parent=1 // pred_fallthru
      _
    // Predicated region
    $region10: #{graph_neural_forward.2} parent=1 // pred_check
      _
    $region11: #{graph_neural_forward.2} parent=1 // pred_check_branch
      %21 = sbr.rel (0) target = $region13
    $region12: #{graph_neural_forward.2} parent=1 // pred_region
      _
    $region13: #{graph_neural_forward.2} parent=1 // pred_fallthru
      _
    // Predicated region
    $region14: #{graph_neural_forward.2} parent=1 // pred_check
      _
    $region15: #{graph_neural_forward.2} parent=1 // pred_check_branch
      %23 = sbr.rel (0) target = $region17
    $region16: #{graph_neural_forward.2} parent=1 // pred_region
      %25 = dma.done [#allocation4], 16
    $region17: #{graph_neural_forward.2} parent=1 // pred_fallthru
      _
    %26 = sfence
    %p27 = scmp.eq.s32.totalorder 0, 0
    // Predicated region
    $region18: #{graph_neural_forward.2} parent=1 // pred_check
      %p28 = pneg %p27
    $region19: #{graph_neural_forward.2} parent=1 // pred_check_branch
      %30 = sbr.rel (%p28) target = $region21
    $region20: #{graph_neural_forward.2} parent=1 // pred_region
      %31 = vst [vmem:[#allocation2] sm:$0xff] 0.0
    $region21: #{graph_neural_forward.2} parent=1 // pred_fallthru
      _
    %s32 = sld [smem:[#allocation3]]
    %s33 = sld [smem:[#allocation3 + $0x1]]
    %v34 = vld [vmem:[%s2] sm:$0xff]
    %v35 = vld [vmem:[%s2 + $0x8] sm:$0xff]
    %v36 = vld [vmem:[%s2 + $0x10] sm:$0xff]
    %v37 = vld [vmem:[%s2 + $0x18] sm:$0xff]
    %v38 = vld [vmem:[%s2 + $0x20] sm:$0xff]
    %v39 = vld [vmem:[%s2 + $0x28] sm:$0xff]
    %v40 = vld [vmem:[%s2 + $0x30] sm:$0xff]
    %v41 = vld [vmem:[%s2 + $0x38] sm:$0xff]
    %v42 = vld [vmem:[%s2 + $0x40] sm:$0xff]
    %v43 = vld [vmem:[%s2 + $0x48] sm:$0xff]
    %v44 = vld [vmem:[%s2 + $0x50] sm:$0xff]
    %v45 = vld [vmem:[%s2 + $0x58] sm:$0xff]
    %v46 = vld [vmem:[%s2 + $0x60] sm:$0xff]
    %v47 = vld [vmem:[%s2 + $0x68] sm:$0xff]
    %v48 = vld [vmem:[%s2 + $0x70] sm:$0xff]
    %v49 = vld [vmem:[%s2 + $0x78] sm:$0xff]
    %s50 = sadd.f32 %s32, 1.0
    %v51 = vstv %s50
    %v52 = vmul.f32 %v34, %v51
    %v53 = vmul.f32 %v35, %v51
    %v54 = vmul.f32 %v36, %v51
    %v55 = vmul.f32 %v37, %v51
    %v56 = vmul.f32 %v38, %v51
    %v57 = vmul.f32 %v39, %v51
    %v58 = vmul.f32 %v40, %v51
    %v59 = vmul.f32 %v41, %v51
    %v60 = vmul.f32 %v42, %v51
    %v61 = vmul.f32 %v43, %v51
    %v62 = vmul.f32 %v44, %v51
    %v63 = vmul.f32 %v45, %v51
    %v64 = vmul.f32 %v46, %v51
    %v65 = vmul.f32 %v47, %v51
    %v66 = vmul.f32 %v48, %v51
    %v67 = vmul.f32 %v49, %v51
    %v68 = vstv %s33
    %v69 = vadd.f32 %v52, %v68
    %v70 = vadd.f32 %v53, %v68
    %v71 = vadd.f32 %v54, %v68
    %v72 = vadd.f32 %v55, %v68
    %v73 = vadd.f32 %v56, %v68
    %v74 = vadd.f32 %v57, %v68
    %v75 = vadd.f32 %v58, %v68
    %v76 = vadd.f32 %v59, %v68
    %v77 = vadd.f32 %v60, %v68
    %v78 = vadd.f32 %v61, %v68
    %v79 = vadd.f32 %v62, %v68
    %v80 = vadd.f32 %v63, %v68
    %v81 = vadd.f32 %v64, %v68
    %v82 = vadd.f32 %v65, %v68
    %v83 = vadd.f32 %v66, %v68
    %v84 = vadd.f32 %v67, %v68
    %v85 = vld [vmem:[#allocation2] sm:$0xff]
    %v86 = vld [vmem:[%s1] sm:$0xff]
    %87 = vmatpush.msra.mxu0 %v84
    %88 = vmatpush.msra.mxu0 %v83
    %89 = vmatpush.msra.mxu0 %v82
    %90 = vmatpush.msra.mxu0 %v81
    %91 = vmatpush.msra.mxu0 %v80
    %92 = vmatpush.msra.mxu0 %v79
    %93 = vmatpush.msra.mxu0 %v78
    %94 = vmatpush.msra.mxu0 %v77
    %95 = vmatpush.msra.mxu0 %v76
    %96 = vmatpush.msra.mxu0 %v75
    %97 = vmatpush.msra.mxu0 %v74
    %98 = vmatpush.msra.mxu0 %v73
    %99 = vmatpush.msra.mxu0 %v72
    %100 = vmatpush.msra.mxu0 %v71
    %101 = vmatpush.msra.mxu0 %v70
    %102 = vmatpush.msra.mxu0 %v69
    %103 = vmatmul.f32.gmra.mxu0 %v86
    %v104 = vpop.f32.mrf.mxu0
    %v105 = vadd.f32 0.0, %v104
    %106 = vdwg.mxu0
    %v107 = vadd.f32 %v85, %v105
    %108 = vst [vmem:[#allocation2] sm:$0xff] %v107
    // Predicated region
    $region22: #{graph_neural_forward.2} parent=1 // pred_check
      %p109 = pneg %p27
    $region23: #{graph_neural_forward.2} parent=1 // pred_check_branch
      %111 = sbr.rel (%p109) target = $region25
    $region24: #{graph_neural_forward.2} parent=1 // pred_region
      %v112 = vld [vmem:[#allocation2] sm:$0xff]
      %113 = vst [vmem:[%s3] sm:$0xff] %v112
    $region25: #{graph_neural_forward.2} parent=1 // pred_fallthru
      _
    // Predicated region
    $region26: #{graph_neural_forward.2} parent=1 // pred_check
      _
    $region27: #{graph_neural_forward.2} parent=1 // pred_check_branch
      %115 = sbr.rel (0) target = $region29
    $region28: #{graph_neural_forward.2} parent=1 // pred_region
      _
    $region29: #{graph_neural_forward.2} parent=1 // pred_fallthru
      _
    // Predicated region
    $region30: #{graph_neural_forward.2} parent=1 // pred_check
      _
    $region31: #{graph_neural_forward.2} parent=1 // pred_check_branch
      %117 = sbr.rel (0) target = $region33
    $region32: #{graph_neural_forward.2} parent=1 // pred_region
      _
    $region33: #{graph_neural_forward.2} parent=1 // pred_fallthru
      _
    %118 = vsyncpa [#allocation4], 1

</llo_original>
